<compile_context>
chip_gen: v7x
topology: tpu7x:2x2x1
jax: 0.10.0
libtpu: 0.0.40
codegen_flags: <defaults>
</compile_context>

<pallas_src>
import functools

import jax
import jax.numpy as jnp
from jax.experimental import pallas as pl
from jax.experimental.pallas import tpu as pltpu


# ----------------------------------------------------------------------------
# Fused Pallas kernel: layer1 + relu + layer2 + log_softmax, all VMEM-resident
# ----------------------------------------------------------------------------
def fused_gcn_kernel(a_ref, x_ref, w1_ref, w2_ref, o_ref, *, num_classes):
    """out = log_softmax( A @ ( relu(A @ (X @ W1)) @ W2_padded ), axis=-1 )

    a_ref  : (N, N)    f32  normalized adjacency
    x_ref  : (N, Fin)  f32  node features
    w1_ref : (Fin, H)  f32
    w2_ref : (H, 128)  f32  class dim zero-padded to 128 lanes (lane-dense out)
    o_ref  : (N, 128)  f32  log-probabilities in lanes [0, num_classes)
    """
    a = a_ref[...]                                              # (N, N) f32

    # ---- layer 1:  h = relu(A @ (X @ W1)) ---------------------------------
    xw1 = jnp.dot(x_ref[...], w1_ref[...],
                  preferred_element_type=jnp.float32)           # (N, H)
    h = jnp.dot(a, xw1, preferred_element_type=jnp.float32)     # (N, H)
    h = jnp.maximum(h, 0.0)                                     # relu (VPU)

    # ---- layer 2:  z = A @ (h @ W2_padded) --------------------------------
    hw2 = jnp.dot(h, w2_ref[...],
                  preferred_element_type=jnp.float32)           # (N, 128)
    z = jnp.dot(a, hw2, preferred_element_type=jnp.float32)     # (N, 128)

    # ---- epilogue: masked row-wise log_softmax over the real class lanes ---
    col = jax.lax.broadcasted_iota(jnp.int32, z.shape, 1)       # lane index
    valid = col < num_classes
    z = jnp.where(valid, z, jnp.float32(-1e30))                 # pad lanes -> -inf-ish
    m = jnp.max(z, axis=-1, keepdims=True)
    s = z - m
    lse = jnp.log(jnp.sum(jnp.exp(s), axis=-1, keepdims=True))  # EUP exp/log
    logp = s - lse
    # Full-lane, unmasked store of the (N, 128) slab; pad lanes zeroed.
    o_ref[...] = jnp.where(valid, logp, 0.0).astype(o_ref.dtype)


# ----------------------------------------------------------------------------
# One-time parameter layout prep (outside the hot path)
# ----------------------------------------------------------------------------
def prepare_w2(w2, lanes=128):
    """Zero-pad W2's class dim to 128 so the kernel's output store is lane-dense.
    Padding columns are exactly zero, so valid-class logits are unchanged."""
    h, c = w2.shape
    assert c <= lanes
    return jnp.pad(w2, ((0, 0), (0, lanes - c)))


# ----------------------------------------------------------------------------
# Wrapper
# ----------------------------------------------------------------------------
def net_forward(x, a_hat, w1, w2_padded, *, num_classes):
    n = x.shape[0]
    c_pad = w2_padded.shape[1]
    vmem = pl.BlockSpec(memory_space=pltpu.MemorySpace.VMEM)
    out_full = pl.pallas_call(
        functools.partial(fused_gcn_kernel, num_classes=num_classes),
        out_shape=jax.ShapeDtypeStruct((n, c_pad), jnp.float32),
        in_specs=[vmem, vmem, vmem, vmem],
        out_specs=vmem,
    )(a_hat, x, w1, w2_padded)
    # Layout plumbing only: strip the lane padding back to (N, C).
    return out_full[:, :num_classes]


# ----------------------------------------------------------------------------
# Deterministic setup + run
# ----------------------------------------------------------------------------
def build_inputs(key, num_nodes=64, num_features=32, hidden=16, num_classes=8):
    k_x, k_adj, k_w1, k_w2 = jax.random.split(key, 4)

    # node features
    x = jax.random.normal(k_x, (num_nodes, num_features), dtype=jnp.float32)

    # synthetic graph -> normalized adjacency A_hat = D^-1/2 (A + I) D^-1/2
    logits = jax.random.uniform(k_adj, (num_nodes, num_nodes))
    adj = (logits < 0.1).astype(jnp.float32)
    adj = jnp.maximum(adj, adj.T)                        # symmetrize
    adj = adj + jnp.eye(num_nodes, dtype=jnp.float32)    # self loops
    deg = jnp.sum(adj, axis=1)
    d_inv_sqrt = 1.0 / jnp.sqrt(deg)
    a_hat = adj * d_inv_sqrt[:, None] * d_inv_sqrt[None, :]

    # GCNConv weights (Glorot-uniform-ish, deterministic)
    def glorot(k, fin, fout):
        lim = jnp.sqrt(6.0 / (fin + fout))
        return jax.random.uniform(k, (fin, fout), jnp.float32, -lim, lim)

    w1 = glorot(k_w1, num_features, hidden)
    w2 = glorot(k_w2, hidden, num_classes)
    return x, a_hat, w1, w2


def reference_forward(x, a_hat, w1, w2):
    h = jnp.maximum(a_hat @ (x @ w1), 0.0)
    z = a_hat @ (h @ w2)
    return jax.nn.log_softmax(z, axis=1)


if __name__ == "__main__":
    key = jax.random.PRNGKey(0)
    num_classes = 8
    x, a_hat, w1, w2 = build_inputs(key, num_classes=num_classes)

    # One-time layout prep (kept out of the hot jitted path).
    w2_padded = prepare_w2(w2)

    fwd = jax.jit(net_forward, static_argnames=("num_classes",))
    out = fwd(x, a_hat, w1, w2_padded, num_classes=num_classes)
    out = jax.block_until_ready(out)

    # sanity: shape, finiteness, rows renormalize, and parity vs pure-JAX f32 ref
    assert out.shape == (64, num_classes)
    assert bool(jnp.all(jnp.isfinite(out)))
    row_sums = jnp.sum(jnp.exp(out), axis=1)
    assert bool(jnp.all(jnp.abs(row_sums - 1.0) < 1e-4))
    ref = reference_forward(x, a_hat, w1, w2)
    assert bool(jnp.max(jnp.abs(out - ref)) < 5e-3)

    print("KERNEL_OK")
</pallas_src>

<mosaic_0001>
module attributes {stable_mosaic.version = 11 : i64} {
  func.func @fused_gcn_kernel(%arg0: memref<64x64xf32, #tpu.memory_space<vmem>>, %arg1: memref<64x32xf32, #tpu.memory_space<vmem>>, %arg2: memref<32x16xf32, #tpu.memory_space<vmem>>, %arg3: memref<16x128xf32, #tpu.memory_space<vmem>>, %arg4: memref<64x128xf32, #tpu.memory_space<vmem>>) attributes {dimension_semantics = [], scalar_prefetch = 0 : i64, scratch_operands = 0 : i64, tpu.core_type = #tpu.core_type<tc>} {
    %c0 = arith.constant 0 : index
    %c0_0 = arith.constant 0 : index
    %0 = vector.load %arg0[%c0, %c0_0] : memref<64x64xf32, #tpu.memory_space<vmem>>, vector<64x64xf32>
    %c0_1 = arith.constant 0 : index
    %c0_2 = arith.constant 0 : index
    %1 = vector.load %arg1[%c0_1, %c0_2] : memref<64x32xf32, #tpu.memory_space<vmem>>, vector<64x32xf32>
    %c0_3 = arith.constant 0 : index
    %c0_4 = arith.constant 0 : index
    %2 = vector.load %arg2[%c0_3, %c0_4] : memref<32x16xf32, #tpu.memory_space<vmem>>, vector<32x16xf32>
    %cst = arith.constant dense<0.000000e+00> : vector<64x16xf32>
    %3 = tpu.matmul %1, %2, %cst {dimension_numbers = #tpu.dot_dimension_numbers<[1], [0], [0], [1], [0, 0, 1, 1], [], []>} : vector<64x32xf32>, vector<32x16xf32>, vector<64x16xf32> -> vector<64x16xf32>
    %cst_5 = arith.constant dense<0.000000e+00> : vector<64x16xf32>
    %4 = tpu.matmul %0, %3, %cst_5 {dimension_numbers = #tpu.dot_dimension_numbers<[1], [0], [0], [1], [0, 0, 1, 1], [], []>} : vector<64x64xf32>, vector<64x16xf32>, vector<64x16xf32> -> vector<64x16xf32>
    %cst_6 = arith.constant 0.000000e+00 : f32
    %5 = vector.broadcast %cst_6 : f32 to vector<64x16xf32>
    %6 = arith.maximumf %4, %5 : vector<64x16xf32>
    %c0_7 = arith.constant 0 : index
    %c0_8 = arith.constant 0 : index
    %7 = vector.load %arg3[%c0_7, %c0_8] : memref<16x128xf32, #tpu.memory_space<vmem>>, vector<16x128xf32>
    %cst_9 = arith.constant dense<0.000000e+00> : vector<64x128xf32>
    %8 = tpu.matmul %6, %7, %cst_9 {dimension_numbers = #tpu.dot_dimension_numbers<[1], [0], [0], [1], [0, 0, 1, 1], [], []>} : vector<64x16xf32>, vector<16x128xf32>, vector<64x128xf32> -> vector<64x128xf32>
    %cst_10 = arith.constant dense<0.000000e+00> : vector<64x128xf32>
    %9 = tpu.matmul %0, %8, %cst_10 {dimension_numbers = #tpu.dot_dimension_numbers<[1], [0], [0], [1], [0, 0, 1, 1], [], []>} : vector<64x64xf32>, vector<64x128xf32>, vector<64x128xf32> -> vector<64x128xf32>
    %10 = tpu.iota {dimensions = array<i32: 1>} : vector<64x128xi32>
    %c8_i32 = arith.constant 8 : i32
    %11 = vector.broadcast %c8_i32 : i32 to vector<64x128xi32>
    %12 = arith.cmpi slt, %10, %11 : vector<64x128xi32>
    %cst_11 = arith.constant -1.000000e+30 : f32
    %13 = vector.broadcast %cst_11 : f32 to vector<64x128xf32>
    %14 = arith.select %12, %9, %13 : vector<64x128xi1>, vector<64x128xf32>
    %cst_12 = arith.constant dense<0xFF800000> : vector<64xf32>
    %15 = vector.multi_reduction <maximumf>, %14, %cst_12 [1] : vector<64x128xf32> to vector<64xf32>
    %16 = vector.shape_cast %15 : vector<64xf32> to vector<64x1xf32>
    %17 = vector.broadcast %16 : vector<64x1xf32> to vector<64x128xf32>
    %18 = arith.subf %14, %17 : vector<64x128xf32>
    %19 = math.exp %18 : vector<64x128xf32>
    %cst_13 = arith.constant dense<0.000000e+00> : vector<64xf32>
    %20 = vector.multi_reduction <add>, %19, %cst_13 [1] : vector<64x128xf32> to vector<64xf32>
    %21 = vector.shape_cast %20 : vector<64xf32> to vector<64x1xf32>
    %22 = math.log %21 : vector<64x1xf32>
    %23 = vector.broadcast %22 : vector<64x1xf32> to vector<64x128xf32>
    %24 = arith.subf %18, %23 : vector<64x128xf32>
    %cst_14 = arith.constant 0.000000e+00 : f32
    %25 = vector.broadcast %cst_14 : f32 to vector<64x128xf32>
    %26 = arith.select %12, %24, %25 : vector<64x128xi1>, vector<64x128xf32>
    %c0_15 = arith.constant 0 : index
    %c0_16 = arith.constant 0 : index
    %27 = vector.load %arg4[%c0_15, %c0_16] : memref<64x128xf32, #tpu.memory_space<vmem>>, vector<64x128xf32>
    tpu.vector_store %arg4[%c0_15, %c0_16], %26 {strides = array<i32>} : memref<64x128xf32, #tpu.memory_space<vmem>>, vector<64x128xf32>,
    return
  }
}

</mosaic_0001>

<llo_original>
// kernel: net_forward.1
$region0: #{net_forward.1}
  #allocation0 [shape = 'u32[]', space=smem, size = 0x4, offset = 0x4, fixed_abs, tag = 'smem constant byte address 0x4 - core index']
  #allocation1 [shape = 'u32[144,128]{1,0:T(1,128)}', space=vmem, size = 0x12000, scoped, tag = 'internal scratch']
  %s0 = inlined_call_operand.vmem [shape: f32[64,64], index: 0, kind: input, shape index: {}]
  %s1 = inlined_call_operand.vmem [shape: f32[64,32], index: 1, kind: input, shape index: {}]
  %s2 = inlined_call_operand.vmem [shape: f32[32,16], index: 2, kind: input, shape index: {}]
  %s3 = inlined_call_operand.vmem [shape: f32[16,128], index: 3, kind: input, shape index: {}]
  %s4 = inlined_call_operand.vmem [shape: f32[64,128], index: 4, kind: output, shape index: {}]
  %s5 = sld [smem:[#allocation0]]
  $region26: #{net_forward.1} parent=0
    _
  %s7 = ssub.s32 1, %s5
  %s8 = scalar_select 0, %s7, %s5
  // Predicated region
  $region2: #{net_forward.1} parent=0 // pred_check
    _
  $region3: #{net_forward.1} parent=0 // pred_check_branch
    %10 = sbr.rel (0) target = $region5
  $region4: #{net_forward.1} parent=0 // pred_region
    _
  $region5: #{net_forward.1} parent=0 // pred_fallthru
    _
  // Predicated region
  $region6: #{net_forward.1} parent=0 // pred_check
    _
  $region7: #{net_forward.1} parent=0 // pred_check_branch
    %12 = sbr.rel (0) target = $region9
  $region8: #{net_forward.1} parent=0 // pred_region
    _
  $region9: #{net_forward.1} parent=0 // pred_fallthru
    _
  // Predicated region
  $region10: #{net_forward.1} parent=0 // pred_check
    _
  $region11: #{net_forward.1} parent=0 // pred_check_branch
    %14 = sbr.rel (0) target = $region13
  $region12: #{net_forward.1} parent=0 // pred_region
    _
  $region13: #{net_forward.1} parent=0 // pred_fallthru
    _
  // Predicated region
  $region14: #{net_forward.1} parent=0 // pred_check
    _
  $region15: #{net_forward.1} parent=0 // pred_check_branch
    %16 = sbr.rel (0) target = $region17
  $region16: #{net_forward.1} parent=0 // pred_region
    _
  $region17: #{net_forward.1} parent=0 // pred_fallthru
    _
  %v17 = vld [vmem:[%s0] sm:$0xff]
  %v18 = vld [vmem:[%s0 + $0x8] sm:$0xff]
  %v19 = vld [vmem:[%s0 + $0x10] sm:$0xff]
  %v20 = vld [vmem:[%s0 + $0x18] sm:$0xff]
  %v21 = vld [vmem:[%s0 + $0x20] sm:$0xff]
  %v22 = vld [vmem:[%s0 + $0x28] sm:$0xff]
  %v23 = vld [vmem:[%s0 + $0x30] sm:$0xff]
  %v24 = vld [vmem:[%s0 + $0x38] sm:$0xff]
  %v25 = vld [vmem:[%s1] sm:$0xff]
  %v26 = vld [vmem:[%s1 + $0x8] sm:$0xff]
  %v27 = vld [vmem:[%s1 + $0x10] sm:$0xff]
  %v28 = vld [vmem:[%s1 + $0x18] sm:$0xff]
  %v29 = vld [vmem:[%s1 + $0x20] sm:$0xff]
  %v30 = vld [vmem:[%s1 + $0x28] sm:$0xff]
  %v31 = vld [vmem:[%s1 + $0x30] sm:$0xff]
  %v32 = vld [vmem:[%s1 + $0x38] sm:$0xff]
  %v33 = vld [vmem:[%s2] sm:$0xff]
  %v34 = vld [vmem:[%s2 + $0x8] sm:$0xff]
  %v35 = vld [vmem:[%s2 + $0x10] sm:$0xff]
  %v36 = vld [vmem:[%s2 + $0x18] sm:$0xff]
  %vm37 = vcmask 261120
  %v39 = vsel %vm37, %v25, 0
  %v42 = vsel %vm37, %v26, 0
  %v45 = vsel %vm37, %v27, 0
  %v48 = vsel %vm37, %v28, 0
  %v51 = vsel %vm37, %v29, 0
  %v54 = vsel %vm37, %v30, 0
  %v57 = vsel %vm37, %v31, 0
  %v60 = vsel %vm37, %v32, 0
  %62 = vmatprep.subr.mxu0 0.0
  %63 = vmatpush1.msra.mxu0 %v33
  %64 = vmatprep.subr.mxu0 0.0
  %65 = vmatpush1.msra.mxu0 %v34
  %66 = vmatprep.subr.mxu0 0.0
  %67 = vmatpush1.msra.mxu0 %v35
  %68 = vmatprep.subr.mxu0 0.0
  %69 = vmatpush1.msra.mxu0 %v36
  %70 = vmatprep.subr.mxu0 0.0
  %71 = vmatpush1.msra.mxu0 0.0
  %72 = vmatprep.subr.mxu0 0.0
  %73 = vmatpush1.msra.mxu0 0.0
  %74 = vmatprep.subr.mxu0 0.0
  %75 = vmatpush1.msra.mxu0 0.0
  %76 = vmatprep.subr.mxu0 0.0
  %77 = vmatpush1.msra.mxu0 0.0
  %78 = vmatprep.subr.mxu0 0.0
  %79 = vmatpush1.msra.mxu0 0.0
  %80 = vmatprep.subr.mxu0 0.0
  %81 = vmatpush1.msra.mxu0 0.0
  %82 = vmatprep.subr.mxu0 0.0
  %83 = vmatpush1.msra.mxu0 0.0
  %84 = vmatprep.subr.mxu0 0.0
  %85 = vmatpush1.msra.mxu0 0.0
  %86 = vmatprep.subr.mxu0 0.0
  %87 = vmatpush1.msra.mxu0 0.0
  %88 = vmatprep.subr.mxu0 0.0
  %89 = vmatpush1.msra.mxu0 0.0
  %90 = vmatprep.subr.mxu0 0.0
  %91 = vmatpush1.msra.mxu0 0.0
  %92 = vmatprep.subr.mxu0 0.0
  %93 = vmatpush1.msra.mxu0 0.0
  %94 = vmatprep.subr.mxu0 0.0
  %95 = vmatpush1.msra.mxu0 0.0
  %96 = vmatprep.subr.mxu0 0.0
  %97 = vmatpush1.msra.mxu0 0.0
  %98 = vmatprep.subr.mxu0 0.0
  %99 = vmatpush1.msra.mxu0 0.0
  %100 = vmatprep.subr.mxu0 0.0
  %101 = vmatpush1.msra.mxu0 0.0
  %102 = vmatprep.subr.mxu0 0.0
  %103 = vmatpush1.msra.mxu0 0.0
  %104 = vmatprep.subr.mxu0 0.0
  %105 = vmatpush1.msra.mxu0 0.0
  %106 = vmatprep.subr.mxu0 0.0
  %107 = vmatpush1.msra.mxu0 0.0
  %108 = vmatprep.subr.mxu0 0.0
  %109 = vmatpush1.msra.mxu0 0.0
  %110 = vmatprep.subr.mxu0 0.0
  %111 = vmatpush1.msra.mxu0 0.0
  %112 = vmatprep.subr.mxu0 0.0
  %113 = vmatpush1.msra.mxu0 0.0
  %114 = vmatprep.subr.mxu0 0.0
  %115 = vmatpush1.msra.mxu0 0.0
  %116 = vmatprep.subr.mxu0 0.0
  %117 = vmatpush1.msra.mxu0 0.0
  %118 = vmatprep.subr.mxu0 0.0
  %119 = vmatpush1.msra.mxu0 0.0
  %120 = vmatprep.subr.mxu0 0.0
  %121 = vmatpush1.msra.mxu0 0.0
  %122 = vmatprep.subr.mxu0 0.0
  %123 = vmatpush1.msra.mxu0 0.0
  %124 = vmatprep.subr.mxu0 0.0
  %125 = vmatpush1.msra.mxu0 0.0
  %126 = vmatprep.mubr.f32.mxu0 0.0
  %127 = vmatmul.mubr.f32.gmra.mrb[0].mxu0 %v39
  %v128 = vpop.f32.mrb[0].mxu0
  %v129 = vadd.f32 0.0, %v128
  %v130 = vpop.f32.mrb[0].mxu0
  %131 = vmatprep.mubr.f32.mxu0 0.0
  %132 = vmatmul.mubr.f32.gmra.mrb[0].mxu0 %v42
  %v133 = vpop.f32.mrb[0].mxu0
  %v134 = vadd.f32 0.0, %v133
  %v135 = vpop.f32.mrb[0].mxu0
  %136 = vmatprep.mubr.f32.mxu0 0.0
  %137 = vmatmul.mubr.f32.gmra.mrb[0].mxu0 %v45
  %v138 = vpop.f32.mrb[0].mxu0
  %v139 = vadd.f32 0.0, %v138
  %v140 = vpop.f32.mrb[0].mxu0
  %141 = vmatprep.mubr.f32.mxu0 0.0
  %142 = vmatmul.mubr.f32.gmra.mrb[0].mxu0 %v48
  %v143 = vpop.f32.mrb[0].mxu0
  %v144 = vadd.f32 0.0, %v143
  %v145 = vpop.f32.mrb[0].mxu0
  %146 = vmatprep.mubr.f32.mxu0 0.0
  %147 = vmatmul.mubr.f32.gmra.mrb[0].mxu0 %v51
  %v148 = vpop.f32.mrb[0].mxu0
  %v149 = vadd.f32 0.0, %v148
  %v150 = vpop.f32.mrb[0].mxu0
  %151 = vmatprep.mubr.f32.mxu0 0.0
  %152 = vmatmul.mubr.f32.gmra.mrb[0].mxu0 %v54
  %v153 = vpop.f32.mrb[0].mxu0
  %v154 = vadd.f32 0.0, %v153
  %v155 = vpop.f32.mrb[0].mxu0
  %156 = vmatprep.mubr.f32.mxu0 0.0
  %157 = vmatmul.mubr.f32.gmra.mrb[0].mxu0 %v57
  %v158 = vpop.f32.mrb[0].mxu0
  %v159 = vadd.f32 0.0, %v158
  %v160 = vpop.f32.mrb[0].mxu0
  %161 = vmatprep.mubr.f32.mxu0 0.0
  %162 = vmatmul.mubr.f32.gmra.mrb[0].mxu0 %v60
  %v163 = vpop.f32.mrb[0].mxu0
  %v164 = vadd.f32 0.0, %v163
  %v165 = vpop.f32.mrb[0].mxu0
  %166 = vdwg.mxu0
  %vm167 = vcmask 523264
  %v169 = vsel %vm167, %v17, 0
  %v172 = vsel %vm167, %v18, 0
  %v175 = vsel %vm167, %v19, 0
  %v178 = vsel %vm167, %v20, 0
  %v181 = vsel %vm167, %v21, 0
  %v184 = vsel %vm167, %v22, 0
  %v187 = vsel %vm167, %v23, 0
  %v190 = vsel %vm167, %v24, 0
  %192 = vmatprep.subr.mxu0 0.0
  %193 = vmatpush1.msra.mxu0 %v129
  %194 = vmatprep.subr.mxu0 0.0
  %195 = vmatpush1.msra.mxu0 %v134
  %196 = vmatprep.subr.mxu0 0.0
  %197 = vmatpush1.msra.mxu0 %v139
  %198 = vmatprep.subr.mxu0 0.0
  %199 = vmatpush1.msra.mxu0 %v144
  %200 = vmatprep.subr.mxu0 0.0
  %201 = vmatpush1.msra.mxu0 %v149
  %202 = vmatprep.subr.mxu0 0.0
  %203 = vmatpush1.msra.mxu0 %v154
  %204 = vmatprep.subr.mxu0 0.0
  %205 = vmatpush1.msra.mxu0 %v159
  %206 = vmatprep.subr.mxu0 0.0
  %207 = vmatpush1.msra.mxu0 %v164
  %208 = vmatprep.subr.mxu0 0.0
  %209 = vmatpush1.msra.mxu0 0.0
  %210 = vmatprep.subr.mxu0 0.0
  %211 = vmatpush1.msra.mxu0 0.0
  %212 = vmatprep.subr.mxu0 0.0
  %213 = vmatpush1.msra.mxu0 0.0
  %214 = vmatprep.subr.mxu0 0.0
  %215 = vmatpush1.msra.mxu0 0.0
  %216 = vmatprep.subr.mxu0 0.0
  %217 = vmatpush1.msra.mxu0 0.0
  %218 = vmatprep.subr.mxu0 0.0
  %219 = vmatpush1.msra.mxu0 0.0
  %220 = vmatprep.subr.mxu0 0.0
  %221 = vmatpush1.msra.mxu0 0.0
  %222 = vmatprep.subr.mxu0 0.0
  %223 = vmatpush1.msra.mxu0 0.0
  %224 = vmatprep.subr.mxu0 0.0
  %225 = vmatpush1.msra.mxu0 0.0
  %226 = vmatprep.subr.mxu0 0.0
  %227 = vmatpush1.msra.mxu0 0.0
  %228 = vmatprep.subr.mxu0 0.0
  %229 = vmatpush1.msra.mxu0 0.0
  %230 = vmatprep.subr.mxu0 0.0
  %231 = vmatpush1.msra.mxu0 0.0
  %232 = vmatprep.subr.mxu0 0.0
  %233 = vmatpush1.msra.mxu0 0.0
  %234 = vmatprep.subr.mxu0 0.0
  %235 = vmatpush1.msra.mxu0 0.0
  %236 = vmatprep.subr.mxu0 0.0
  %237 = vmatpush1.msra.mxu0 0.0
  %238 = vmatprep.subr.mxu0 0.0
  %239 = vmatpush1.msra.mxu0 0.0
  %240 = vmatprep.subr.mxu0 0.0
  %241 = vmatpush1.msra.mxu0 0.0
  %242 = vmatprep.subr.mxu0 0.0
  %243 = vmatpush1.msra.mxu0 0.0
  %244 = vmatprep.subr.mxu0 0.0
  %245 = vmatpush1.msra.mxu0 0.0
  %246 = vmatprep.subr.mxu0 0.0
  %247 = vmatpush1.msra.mxu0 0.0
  %248 = vmatprep.subr.mxu0 0.0
  %249 = vmatpush1.msra.mxu0 0.0
  %250 = vmatprep.subr.mxu0 0.0
  %251 = vmatpush1.msra.mxu0 0.0
  %252 = vmatprep.subr.mxu0 0.0
  %253 = vmatpush1.msra.mxu0 0.0
  %254 = vmatprep.subr.mxu0 0.0
  %255 = vmatpush1.msra.mxu0 0.0
  %256 = vmatprep.mubr.f32.mxu0 0.0
  %257 = vmatmul.mubr.f32.gmra.mrb[0].mxu0 %v169
  %v258 = vpop.f32.mrb[0].mxu0
  %v259 = vadd.f32 0.0, %v258
  %v260 = vpop.f32.mrb[0].mxu0
  %261 = vmatprep.mubr.f32.mxu0 0.0
  %262 = vmatmul.mubr.f32.gmra.mrb[0].mxu0 %v172
  %v263 = vpop.f32.mrb[0].mxu0
  %v264 = vadd.f32 0.0, %v263
  %v265 = vpop.f32.mrb[0].mxu0
  %266 = vmatprep.mubr.f32.mxu0 0.0
  %267 = vmatmul.mubr.f32.gmra.mrb[0].mxu0 %v175
  %v268 = vpop.f32.mrb[0].mxu0
  %v269 = vadd.f32 0.0, %v268
  %v270 = vpop.f32.mrb[0].mxu0
  %271 = vmatprep.mubr.f32.mxu0 0.0
  %272 = vmatmul.mubr.f32.gmra.mrb[0].mxu0 %v178
  %v273 = vpop.f32.mrb[0].mxu0
  %v274 = vadd.f32 0.0, %v273
  %v275 = vpop.f32.mrb[0].mxu0
  %276 = vmatprep.mubr.f32.mxu0 0.0
  %277 = vmatmul.mubr.f32.gmra.mrb[0].mxu0 %v181
  %v278 = vpop.f32.mrb[0].mxu0
  %v279 = vadd.f32 0.0, %v278
  %v280 = vpop.f32.mrb[0].mxu0
  %281 = vmatprep.mubr.f32.mxu0 0.0
  %282 = vmatmul.mubr.f32.gmra.mrb[0].mxu0 %v184
  %v283 = vpop.f32.mrb[0].mxu0
  %v284 = vadd.f32 0.0, %v283
  %v285 = vpop.f32.mrb[0].mxu0
  %286 = vmatprep.mubr.f32.mxu0 0.0
  %287 = vmatmul.mubr.f32.gmra.mrb[0].mxu0 %v187
  %v288 = vpop.f32.mrb[0].mxu0
  %v289 = vadd.f32 0.0, %v288
  %v290 = vpop.f32.mrb[0].mxu0
  %291 = vmatprep.mubr.f32.mxu0 0.0
  %292 = vmatmul.mubr.f32.gmra.mrb[0].mxu0 %v190
  %v293 = vpop.f32.mrb[0].mxu0
  %v294 = vadd.f32 0.0, %v293
  %v295 = vpop.f32.mrb[0].mxu0
  %296 = vdwg.mxu0
  %v297 = vmax.f32 %v259, 0.0
  %v298 = vmax.f32 %v264, 0.0
  %v299 = vmax.f32 %v269, 0.0
  %v300 = vmax.f32 %v274, 0.0
  %v301 = vmax.f32 %v279, 0.0
  %v302 = vmax.f32 %v284, 0.0
  %v303 = vmax.f32 %v289, 0.0
  %v304 = vmax.f32 %v294, 0.0
  %v305 = vld [vmem:[%s3] sm:$0xff]
  %v306 = vld [vmem:[%s3 + $0x8] sm:$0xff]
  %vm307 = vcmask 130048
  %v309 = vsel %vm307, %v297, 0
  %v312 = vsel %vm307, %v298, 0
  %v315 = vsel %vm307, %v299, 0
  %v318 = vsel %vm307, %v300, 0
  %v321 = vsel %vm307, %v301, 0
  %v324 = vsel %vm307, %v302, 0
  %v327 = vsel %vm307, %v303, 0
  %v330 = vsel %vm307, %v304, 0
  %332 = vmatprep.subr.mxu0 0.0
  %333 = vmatpush1.msra.mxu0 %v305
  %334 = vmatprep.subr.mxu0 0.0
  %335 = vmatpush1.msra.mxu0 %v306
  %336 = vmatprep.subr.mxu0 0.0
  %337 = vmatpush1.msra.mxu0 0.0
  %338 = vmatprep.subr.mxu0 0.0
  %339 = vmatpush1.msra.mxu0 0.0
  %340 = vmatprep.subr.mxu0 0.0
  %341 = vmatpush1.msra.mxu0 0.0
  %342 = vmatprep.subr.mxu0 0.0
  %343 = vmatpush1.msra.mxu0 0.0
  %344 = vmatprep.subr.mxu0 0.0
  %345 = vmatpush1.msra.mxu0 0.0
  %346 = vmatprep.subr.mxu0 0.0
  %347 = vmatpush1.msra.mxu0 0.0
  %348 = vmatprep.subr.mxu0 0.0
  %349 = vmatpush1.msra.mxu0 0.0
  %350 = vmatprep.subr.mxu0 0.0
  %351 = vmatpush1.msra.mxu0 0.0
  %352 = vmatprep.subr.mxu0 0.0
  %353 = vmatpush1.msra.mxu0 0.0
  %354 = vmatprep.subr.mxu0 0.0
  %355 = vmatpush1.msra.mxu0 0.0
  %356 = vmatprep.subr.mxu0 0.0
  %357 = vmatpush1.msra.mxu0 0.0
  %358 = vmatprep.subr.mxu0 0.0
  %359 = vmatpush1.msra.mxu0 0.0
  %360 = vmatprep.subr.mxu0 0.0
  %361 = vmatpush1.msra.mxu0 0.0
  %362 = vmatprep.subr.mxu0 0.0
  %363 = vmatpush1.msra.mxu0 0.0
  %364 = vmatprep.subr.mxu0 0.0
  %365 = vmatpush1.msra.mxu0 0.0
  %366 = vmatprep.subr.mxu0 0.0
  %367 = vmatpush1.msra.mxu0 0.0
  %368 = vmatprep.subr.mxu0 0.0
  %369 = vmatpush1.msra.mxu0 0.0
  %370 = vmatprep.subr.mxu0 0.0
  %371 = vmatpush1.msra.mxu0 0.0
  %372 = vmatprep.subr.mxu0 0.0
  %373 = vmatpush1.msra.mxu0 0.0
  %374 = vmatprep.subr.mxu0 0.0
  %375 = vmatpush1.msra.mxu0 0.0
  %376 = vmatprep.subr.mxu0 0.0
  %377 = vmatpush1.msra.mxu0 0.0
  %378 = vmatprep.subr.mxu0 0.0
  %379 = vmatpush1.msra.mxu0 0.0
  %380 = vmatprep.subr.mxu0 0.0
  %381 = vmatpush1.msra.mxu0 0.0
  %382 = vmatprep.subr.mxu0 0.0
  %383 = vmatpush1.msra.mxu0 0.0
  %384 = vmatprep.subr.mxu0 0.0
  %385 = vmatpush1.msra.mxu0 0.0
  %386 = vmatprep.subr.mxu0 0.0
  %387 = vmatpush1.msra.mxu0 0.0
  %388 = vmatprep.subr.mxu0 0.0
  %389 = vmatpush1.msra.mxu0 0.0
  %390 = vmatprep.subr.mxu0 0.0
  %391 = vmatpush1.msra.mxu0 0.0
  %392 = vmatprep.subr.mxu0 0.0
  %393 = vmatpush1.msra.mxu0 0.0
  %394 = vmatprep.subr.mxu0 0.0
  %395 = vmatpush1.msra.mxu0 0.0
  %396 = vmatprep.mubr.f32.mxu0 0.0
  %397 = vmatmul.mubr.f32.gmra.mrb[0].mxu0 %v309
  %v398 = vpop.f32.mrb[0].mxu0
  %v399 = vadd.f32 0.0, %v398
  %v400 = vpop.f32.mrb[0].mxu0
  %401 = vmatprep.mubr.f32.mxu0 0.0
  %402 = vmatmul.mubr.f32.gmra.mrb[0].mxu0 %v312
  %v403 = vpop.f32.mrb[0].mxu0
  %v404 = vadd.f32 0.0, %v403
  %v405 = vpop.f32.mrb[0].mxu0
  %406 = vmatprep.mubr.f32.mxu0 0.0
  %407 = vmatmul.mubr.f32.gmra.mrb[0].mxu0 %v315
  %v408 = vpop.f32.mrb[0].mxu0
  %v409 = vadd.f32 0.0, %v408
  %v410 = vpop.f32.mrb[0].mxu0
  %411 = vmatprep.mubr.f32.mxu0 0.0
  %412 = vmatmul.mubr.f32.gmra.mrb[0].mxu0 %v318
  %v413 = vpop.f32.mrb[0].mxu0
  %v414 = vadd.f32 0.0, %v413
  %v415 = vpop.f32.mrb[0].mxu0
  %416 = vmatprep.mubr.f32.mxu0 0.0
  %417 = vmatmul.mubr.f32.gmra.mrb[0].mxu0 %v321
  %v418 = vpop.f32.mrb[0].mxu0
  %v419 = vadd.f32 0.0, %v418
  %v420 = vpop.f32.mrb[0].mxu0
  %421 = vmatprep.mubr.f32.mxu0 0.0
  %422 = vmatmul.mubr.f32.gmra.mrb[0].mxu0 %v324
  %v423 = vpop.f32.mrb[0].mxu0
  %v424 = vadd.f32 0.0, %v423
  %v425 = vpop.f32.mrb[0].mxu0
  %426 = vmatprep.mubr.f32.mxu0 0.0
  %427 = vmatmul.mubr.f32.gmra.mrb[0].mxu0 %v327
  %v428 = vpop.f32.mrb[0].mxu0
  %v429 = vadd.f32 0.0, %v428
  %v430 = vpop.f32.mrb[0].mxu0
  %431 = vmatprep.mubr.f32.mxu0 0.0
  %432 = vmatmul.mubr.f32.gmra.mrb[0].mxu0 %v330
  %v433 = vpop.f32.mrb[0].mxu0
  %v434 = vadd.f32 0.0, %v433
  %v435 = vpop.f32.mrb[0].mxu0
  %436 = vdwg.mxu0
  %437 = vmatprep.subr.mxu0 0.0
  %438 = vmatpush1.msra.mxu0 %v399
  %439 = vmatprep.subr.mxu0 0.0
  %440 = vmatpush1.msra.mxu0 %v404
  %441 = vmatprep.subr.mxu0 0.0
  %442 = vmatpush1.msra.mxu0 %v409
  %443 = vmatprep.subr.mxu0 0.0
  %444 = vmatpush1.msra.mxu0 %v414
  %445 = vmatprep.subr.mxu0 0.0
  %446 = vmatpush1.msra.mxu0 %v419
  %447 = vmatprep.subr.mxu0 0.0
  %448 = vmatpush1.msra.mxu0 %v424
  %449 = vmatprep.subr.mxu0 0.0
  %450 = vmatpush1.msra.mxu0 %v429
  %451 = vmatprep.subr.mxu0 0.0
  %452 = vmatpush1.msra.mxu0 %v434
  %453 = vmatprep.subr.mxu0 0.0
  %454 = vmatpush1.msra.mxu0 0.0
  %455 = vmatprep.subr.mxu0 0.0
  %456 = vmatpush1.msra.mxu0 0.0
  %457 = vmatprep.subr.mxu0 0.0
  %458 = vmatpush1.msra.mxu0 0.0
  %459 = vmatprep.subr.mxu0 0.0
  %460 = vmatpush1.msra.mxu0 0.0
  %461 = vmatprep.subr.mxu0 0.0
  %462 = vmatpush1.msra.mxu0 0.0
  %463 = vmatprep.subr.mxu0 0.0
  %464 = vmatpush1.msra.mxu0 0.0
  %465 = vmatprep.subr.mxu0 0.0
  %466 = vmatpush1.msra.mxu0 0.0
  %467 = vmatprep.subr.mxu0 0.0
  %468 = vmatpush1.msra.mxu0 0.0
  %469 = vmatprep.subr.mxu0 0.0
  %470 = vmatpush1.msra.mxu0 0.0
  %471 = vmatprep.subr.mxu0 0.0
  %472 = vmatpush1.msra.mxu0 0.0
  %473 = vmatprep.subr.mxu0 0.0
  %474 = vmatpush1.msra.mxu0 0.0
  %475 = vmatprep.subr.mxu0 0.0
  %476 = vmatpush1.msra.mxu0 0.0
  %477 = vmatprep.subr.mxu0 0.0
  %478 = vmatpush1.msra.mxu0 0.0
  %479 = vmatprep.subr.mxu0 0.0
  %480 = vmatpush1.msra.mxu0 0.0
  %481 = vmatprep.subr.mxu0 0.0
  %482 = vmatpush1.msra.mxu0 0.0
  %483 = vmatprep.subr.mxu0 0.0
  %484 = vmatpush1.msra.mxu0 0.0
  %485 = vmatprep.subr.mxu0 0.0
  %486 = vmatpush1.msra.mxu0 0.0
  %487 = vmatprep.subr.mxu0 0.0
  %488 = vmatpush1.msra.mxu0 0.0
  %489 = vmatprep.subr.mxu0 0.0
  %490 = vmatpush1.msra.mxu0 0.0
  %491 = vmatprep.subr.mxu0 0.0
  %492 = vmatpush1.msra.mxu0 0.0
  %493 = vmatprep.subr.mxu0 0.0
  %494 = vmatpush1.msra.mxu0 0.0
  %495 = vmatprep.subr.mxu0 0.0
  %496 = vmatpush1.msra.mxu0 0.0
  %497 = vmatprep.subr.mxu0 0.0
  %498 = vmatpush1.msra.mxu0 0.0
  %499 = vmatprep.subr.mxu0 0.0
  %500 = vmatpush1.msra.mxu0 0.0
  %501 = vmatprep.mubr.f32.mxu0 0.0
  %502 = vmatmul.mubr.f32.gmra.mrb[0].mxu0 %v169
  %v503 = vpop.f32.mrb[0].mxu0
  %v504 = vadd.f32 0.0, %v503
  %v505 = vpop.f32.mrb[0].mxu0
  %506 = vmatprep.mubr.f32.mxu0 0.0
  %507 = vmatmul.mubr.f32.gmra.mrb[0].mxu0 %v172
  %v508 = vpop.f32.mrb[0].mxu0
  %v509 = vadd.f32 0.0, %v508
  %v510 = vpop.f32.mrb[0].mxu0
  %511 = vmatprep.mubr.f32.mxu0 0.0
  %512 = vmatmul.mubr.f32.gmra.mrb[0].mxu0 %v175
  %v513 = vpop.f32.mrb[0].mxu0
  %v514 = vadd.f32 0.0, %v513
  %v515 = vpop.f32.mrb[0].mxu0
  %516 = vmatprep.mubr.f32.mxu0 0.0
  %517 = vmatmul.mubr.f32.gmra.mrb[0].mxu0 %v178
  %v518 = vpop.f32.mrb[0].mxu0
  %v519 = vadd.f32 0.0, %v518
  %v520 = vpop.f32.mrb[0].mxu0
  %521 = vmatprep.mubr.f32.mxu0 0.0
  %522 = vmatmul.mubr.f32.gmra.mrb[0].mxu0 %v181
  %v523 = vpop.f32.mrb[0].mxu0
  %v524 = vadd.f32 0.0, %v523
  %v525 = vpop.f32.mrb[0].mxu0
  %526 = vmatprep.mubr.f32.mxu0 0.0
  %527 = vmatmul.mubr.f32.gmra.mrb[0].mxu0 %v184
  %v528 = vpop.f32.mrb[0].mxu0
  %v529 = vadd.f32 0.0, %v528
  %v530 = vpop.f32.mrb[0].mxu0
  %531 = vmatprep.mubr.f32.mxu0 0.0
  %532 = vmatmul.mubr.f32.gmra.mrb[0].mxu0 %v187
  %v533 = vpop.f32.mrb[0].mxu0
  %v534 = vadd.f32 0.0, %v533
  %v535 = vpop.f32.mrb[0].mxu0
  %536 = vmatprep.mubr.f32.mxu0 0.0
  %537 = vmatmul.mubr.f32.gmra.mrb[0].mxu0 %v190
  %v538 = vpop.f32.mrb[0].mxu0
  %v539 = vadd.f32 0.0, %v538
  %v540 = vpop.f32.mrb[0].mxu0
  %541 = vdwg.mxu0
  %v542 = vlaneseq
  %v543 = vand.u32 %v542, 127
  %vm544 = vcmp.lt.s32.totalorder %v543, 8
  %v545 = vsel %vm544, %v504, -1e+30
  %v546 = vsel %vm544, %v509, -1e+30
  %v547 = vsel %vm544, %v514, -1e+30
  %v548 = vsel %vm544, %v519, -1e+30
  %v549 = vsel %vm544, %v524, -1e+30
  %v550 = vsel %vm544, %v529, -1e+30
  %v551 = vsel %vm544, %v534, -1e+30
  %v552 = vsel %vm544, %v539, -1e+30
  %553 = vmax.xlane.f32.xlu0 %v545
  %v554 = vpop.xlane.xlu0 %553
  %555 = vmax.xlane.f32.xlu0 %v546
  %v556 = vpop.xlane.xlu0 %555
  %557 = vmax.xlane.f32.xlu0 %v547
  %v558 = vpop.xlane.xlu0 %557
  %559 = vmax.xlane.f32.xlu0 %v548
  %v560 = vpop.xlane.xlu0 %559
  %561 = vmax.xlane.f32.xlu0 %v549
  %v562 = vpop.xlane.xlu0 %561
  %563 = vmax.xlane.f32.xlu0 %v550
  %v564 = vpop.xlane.xlu0 %563
  %565 = vmax.xlane.f32.xlu0 %v551
  %v566 = vpop.xlane.xlu0 %565
  %567 = vmax.xlane.f32.xlu0 %v552
  %v568 = vpop.xlane.xlu0 %567
  %v569 = vsub.f32 %v545, %v554
  %v570 = vsub.f32 %v546, %v556
  %v571 = vsub.f32 %v547, %v558
  %v572 = vsub.f32 %v548, %v560
  %v573 = vsub.f32 %v549, %v562
  %v574 = vsub.f32 %v550, %v564
  %v575 = vsub.f32 %v551, %v566
  %v576 = vsub.f32 %v552, %v568
  %v577 = vmul.f32 %v569, 1.442695
  %v578 = vpow.pop %v577
  %v579 = vmul.f32 %v570, 1.442695
  %v580 = vpow.pop %v579
  %v581 = vmul.f32 %v571, 1.442695
  %v582 = vpow.pop %v581
  %v583 = vmul.f32 %v572, 1.442695
  %v584 = vpow.pop %v583
  %v585 = vmul.f32 %v573, 1.442695
  %v586 = vpow.pop %v585
  %v587 = vmul.f32 %v574, 1.442695
  %v588 = vpow.pop %v587
  %v589 = vmul.f32 %v575, 1.442695
  %v590 = vpow.pop %v589
  %v591 = vmul.f32 %v576, 1.442695
  %v592 = vpow.pop %v591
  %593 = vadd.xlane.f32.xlu0 %v578
  %v594 = vpop.xlane.xlu0 %593
  %595 = vadd.xlane.f32.xlu0 %v580
  %v596 = vpop.xlane.xlu0 %595
  %597 = vadd.xlane.f32.xlu0 %v582
  %v598 = vpop.xlane.xlu0 %597
  %599 = vadd.xlane.f32.xlu0 %v584
  %v600 = vpop.xlane.xlu0 %599
  %601 = vadd.xlane.f32.xlu0 %v586
  %v602 = vpop.xlane.xlu0 %601
  %603 = vadd.xlane.f32.xlu0 %v588
  %v604 = vpop.xlane.xlu0 %603
  %605 = vadd.xlane.f32.xlu0 %v590
  %v606 = vpop.xlane.xlu0 %605
  %607 = vadd.xlane.f32.xlu0 %v592
  %v608 = vpop.xlane.xlu0 %607
  %v609 = vlog2.pop %v594
  %v610 = vmul.f32 %v609, 0.6931472
  %v611 = vlog2.pop %v596
  %v612 = vmul.f32 %v611, 0.6931472
  %v613 = vlog2.pop %v598
  %v614 = vmul.f32 %v613, 0.6931472
  %v615 = vlog2.pop %v600
  %v616 = vmul.f32 %v615, 0.6931472
  %v617 = vlog2.pop %v602
  %v618 = vmul.f32 %v617, 0.6931472
  %v619 = vlog2.pop %v604
  %v620 = vmul.f32 %v619, 0.6931472
  %v621 = vlog2.pop %v606
  %v622 = vmul.f32 %v621, 0.6931472
  %v623 = vlog2.pop %v608
  %v624 = vmul.f32 %v623, 0.6931472
  %v625 = vsub.f32 %v569, %v610
  %v626 = vsub.f32 %v570, %v612
  %v627 = vsub.f32 %v571, %v614
  %v628 = vsub.f32 %v572, %v616
  %v629 = vsub.f32 %v573, %v618
  %v630 = vsub.f32 %v574, %v620
  %v631 = vsub.f32 %v575, %v622
  %v632 = vsub.f32 %v576, %v624
  %v633 = vsel %vm544, %v625, 0.0
  %v634 = vsel %vm544, %v626, 0.0
  %v635 = vsel %vm544, %v627, 0.0
  %v636 = vsel %vm544, %v628, 0.0
  %v637 = vsel %vm544, %v629, 0.0
  %v638 = vsel %vm544, %v630, 0.0
  %v639 = vsel %vm544, %v631, 0.0
  %v640 = vsel %vm544, %v632, 0.0
  %641 = vst [vmem:[%s4] sm:$0xff] %v633
  %642 = vst [vmem:[%s4 + $0x8] sm:$0xff] %v634
  %643 = vst [vmem:[%s4 + $0x10] sm:$0xff] %v635
  %644 = vst [vmem:[%s4 + $0x18] sm:$0xff] %v636
  %645 = vst [vmem:[%s4 + $0x20] sm:$0xff] %v637
  %646 = vst [vmem:[%s4 + $0x28] sm:$0xff] %v638
  %647 = vst [vmem:[%s4 + $0x30] sm:$0xff] %v639
  %648 = vst [vmem:[%s4 + $0x38] sm:$0xff] %v640
  // Predicated region
  $region18: #{net_forward.1} parent=0 // pred_check
    _
  $region19: #{net_forward.1} parent=0 // pred_check_branch
    %650 = sbr.rel (0) target = $region21
  $region20: #{net_forward.1} parent=0 // pred_region
    _
  $region21: #{net_forward.1} parent=0 // pred_fallthru
    _
  // Predicated region
  $region22: #{net_forward.1} parent=0 // pred_check
    _
  $region23: #{net_forward.1} parent=0 // pred_check_branch
    %652 = sbr.rel (0) target = $region25
  $region24: #{net_forward.1} parent=0 // pred_region
    _
  $region25: #{net_forward.1} parent=0 // pred_fallthru
    _

</llo_original>
